<compile_context>
chip_gen: v7x
topology: tpu7x:2x2x1
jax: 0.10.0
libtpu: 0.0.40
codegen_flags: <defaults>
</compile_context>

<pallas_src>
import jax
import jax.numpy as jnp
from jax.experimental import pallas as pl
from jax.experimental.pallas import tpu as pltpu


_DEFAULT_VMEM_CAP = 64 << 20  # conservative (v7x-sized) fallback


def _vmem_capacity_bytes():
    try:
        return int(pltpu.get_tpu_info().vmem_capacity_bytes)
    except Exception:
        return _DEFAULT_VMEM_CAP


def _pick_tile_rows(n_rows, d, vmem_cap_bytes, tile_rows=None):
    """Largest row tile such that ~8 f32 copies of one (TM, D) tile
    (double-buffered input + in-kernel intermediates + slack) stay under
    physical VMEM.  128 MiB (v5e/v6e) -> TM=1024 @ D=4096 f32; 64 MiB (v7x)
    -> TM=512."""
    if tile_rows is None:
        tm = 1024
        while tm > 128 and tm * d * 4 * 8 > vmem_cap_bytes:
            tm //= 2
    else:
        tm = max(8, (int(tile_rows) // 8) * 8)  # multiple of 8 when < n_rows
    if n_rows <= tm:
        return n_rows  # single full-extent tile, no padding needed
    return tm


def heads_kernel(h_ref, w_ref, vlab_ref, tlab_ref, sc_ref,
                 vlog_ref, tlog_ref, vloss_ref, tloss_ref, loss_ref,
                 vsum_ref, vcnt_ref, tsum_ref, tcnt_ref):
    """Per row-tile: both rank-1 linear heads (+tanh on value head), masked
    MSE partial sums accumulated in VMEM scratch, finalize on the last tile.

    sc_ref (SMEM f32[6]): [b_value, b_time, lm_loss, lm_loss_coef,
                           value_loss_coef, time_loss_coef]
    """
    i = pl.program_id(0)

    @pl.when(i == 0)
    def _init():
        vsum_ref[...] = jnp.zeros_like(vsum_ref)
        vcnt_ref[...] = jnp.zeros_like(vcnt_ref)
        tsum_ref[...] = jnp.zeros_like(tsum_ref)
        tcnt_ref[...] = jnp.zeros_like(tcnt_ref)

    # Load the hidden tile once (native dtype) and upcast in VMEM/vregs.
    h = h_ref[...].astype(jnp.float32)          # (TM, D)
    wv = w_ref[0:1, :]                          # (1, D) resident fused weights
    wt = w_ref[1:2, :]                          # (1, D)

    # Linear(D, 1): broadcast-multiply (VPU) + lane reduction (XLU).  Output
    # width is 1, so the MXU would be wasted; the VPU/XLU path hides fully
    # under the hidden-state DMA.
    v_raw = jnp.sum(h * wv, axis=-1, keepdims=True) + sc_ref[0]   # (TM, 1)
    t_raw = jnp.sum(h * wt, axis=-1, keepdims=True) + sc_ref[1]   # (TM, 1)

    v = jnp.tanh(v_raw)        # value_head: Linear -> Flatten -> Tanh (EUP)
    t = t_raw                  # time_head:  Linear -> Flatten

    vlog_ref[...] = v
    tlog_ref[...] = t

    # Masked-MSE partial sums; -100.0 is the "ignore" sentinel.  Padded tail
    # rows (when B*T % TM != 0) carry the sentinel too, so they never count.
    vlab = vlab_ref[...]                        # (TM, 1)
    tlab = tlab_ref[...]
    vmask = (vlab != -100.0).astype(jnp.float32)
    tmask = (tlab != -100.0).astype(jnp.float32)
    vdiff = v - vlab
    tdiff = t - tlab
    vsum_ref[...] += vmask * vdiff * vdiff
    vcnt_ref[...] += vmask
    tsum_ref[...] += tmask * tdiff * tdiff
    tcnt_ref[...] += tmask

    @pl.when(i == pl.num_programs(0) - 1)
    def _finalize():
        vs = jnp.sum(vsum_ref[...], axis=0, keepdims=True)   # (1, 1)
        vc = jnp.sum(vcnt_ref[...], axis=0, keepdims=True)
        ts = jnp.sum(tsum_ref[...], axis=0, keepdims=True)
        tc = jnp.sum(tcnt_ref[...], axis=0, keepdims=True)
        vloss = jnp.where(vc > 0.0, vs / jnp.maximum(vc, 1.0),
                          jnp.zeros_like(vs))
        tloss = jnp.where(tc > 0.0, ts / jnp.maximum(tc, 1.0),
                          jnp.zeros_like(ts))
        vloss_ref[...] = vloss
        tloss_ref[...] = tloss
        lm_term = sc_ref[2] * sc_ref[3]
        value_coef = sc_ref[4]
        # NOTE: time_loss is scaled by value_loss_coef exactly as in the
        # reference PyTorch code; sc_ref[5] (time_loss_coef) is unused.
        loss_ref[...] = lm_term + vloss * value_coef + tloss * value_coef


def regression_head_forward(hidden, wv, wt, bv, bt, value_labels, time_labels,
                            lm_loss=0.0, lm_loss_coef=1.0, value_loss_coef=1.0,
                            time_loss_coef=1.0, tile_rows=None):
    """Runs the Pallas kernel. Returns a dict mirroring the module outputs."""
    B, T, D = hidden.shape
    N = B * T
    cap = _vmem_capacity_bytes()
    TM = _pick_tile_rows(N, D, cap, tile_rows)
    G = pl.cdiv(N, TM)
    Npad = G * TM

    # Hidden stays in its native dtype (no wrapper-side f32 copy in HBM);
    # the kernel upcasts each tile after the DMA.
    h2 = hidden.reshape(N, D)
    if Npad != N:
        h2 = jnp.pad(h2, ((0, Npad - N), (0, 0)))

    def _prep_labels(lab):
        lab2 = lab.reshape(N, 1).astype(jnp.float32)
        if Npad != N:
            # pad with the ignore sentinel so the tail never enters the loss
            lab2 = jnp.pad(lab2, ((0, Npad - N), (0, 0)),
                           constant_values=-100.0)
        return lab2

    vlab = _prep_labels(value_labels)
    tlab = _prep_labels(time_labels)

    w2 = jnp.stack([wv, wt], axis=0).astype(jnp.float32)      # (2, D) fused
    sc = jnp.array([bv, bt, lm_loss, lm_loss_coef, value_loss_coef,
                    time_loss_coef], dtype=jnp.float32)

    row_in_spec = pl.BlockSpec((TM, 1), lambda i: (i, 0))
    row_out_spec = pl.BlockSpec((TM, 1), lambda i: (i, 0))
    scalar_out_spec = pl.BlockSpec((1, 1), lambda i: (0, 0))   # resident acc

    grid_spec = pltpu.PrefetchScalarGridSpec(
        num_scalar_prefetch=0,
        grid=(G,),
        in_specs=[
            pl.BlockSpec((TM, D), lambda i: (i, 0)),   # hidden tile, pipelined
            pl.BlockSpec((2, D), lambda i: (0, 0)),    # weights, VMEM-resident
            row_in_spec,                               # value labels
            row_in_spec,                               # time labels
            pl.BlockSpec(memory_space=pltpu.MemorySpace.SMEM),  # scalars
        ],
        out_specs=[
            row_out_spec,                              # value logits
            row_out_spec,                              # time logits
            scalar_out_spec,                           # value_loss
            scalar_out_spec,                           # time_loss
            scalar_out_spec,                           # total loss
        ],
        scratch_shapes=[pltpu.VMEM((TM, 1), jnp.float32)] * 4,
    )

    out_shapes = (
        jax.ShapeDtypeStruct((Npad, 1), jnp.float32),  # value logits (flat)
        jax.ShapeDtypeStruct((Npad, 1), jnp.float32),  # time logits (flat)
        jax.ShapeDtypeStruct((1, 1), jnp.float32),     # value_loss
        jax.ShapeDtypeStruct((1, 1), jnp.float32),     # time_loss
        jax.ShapeDtypeStruct((1, 1), jnp.float32),     # total loss
    )

    vmem_limit = max(32 << 20, min(cap - (16 << 20), 96 << 20))

    vlog, tlog, vloss, tloss, loss = pl.pallas_call(
        heads_kernel,
        out_shape=out_shapes,
        grid_spec=grid_spec,
        compiler_params=pltpu.CompilerParams(
            # the row axis carries the loss accumulators -> "arbitrary"
            dimension_semantics=("arbitrary",),
            vmem_limit_bytes=vmem_limit,
        ),
    )(h2, w2, vlab, tlab, sc)

    return {
        "value_logits": vlog[:N, 0].reshape(B, T),
        "time_logits": tlog[:N, 0].reshape(B, T),
        "value_loss": vloss[0, 0],
        "time_loss": tloss[0, 0],
        "loss": loss[0, 0],
    }


def _ref_forward(hidden, wv, wt, bv, bt, vlab, tlab,
                 lm_loss, lm_loss_coef, value_loss_coef):
    """Pure-JAX reference of the same math (full f32, no MXU rounding)."""
    hf = hidden.astype(jnp.float32)
    v = jnp.tanh(jnp.sum(hf * wv[None, None, :], axis=-1) + bv)
    t = jnp.sum(hf * wt[None, None, :], axis=-1) + bt

    def mmse(pred, lab):
        mask = lab != -100.0
        sq = (pred - lab) ** 2
        cnt = jnp.sum(mask)
        return jnp.where(cnt > 0,
                         jnp.sum(jnp.where(mask, sq, 0.0)) / jnp.maximum(cnt, 1),
                         0.0)

    vl = mmse(v, vlab)
    tl = mmse(t, tlab)
    # Quirk preserved: time loss also scaled by value_loss_coef.
    loss = lm_loss * lm_loss_coef + vl * value_loss_coef + tl * value_loss_coef
    return v, t, vl, tl, loss


def _run_case(seed, B, T, D, vocab=50, tile_rows=None, all_ignore_value=False,
              lm_loss=0.0, lm_loss_coef=1.0, value_loss_coef=1.0,
              time_loss_coef=1.0):
    key = jax.random.PRNGKey(seed)
    (k_emb, k_wv, k_wt, k_bv, k_bt, k_ids,
     k_vl, k_tl, k_m1, k_m2) = jax.random.split(key, 10)

    # synthetic backbone: deterministic embedding lookup -> last_hidden_states
    embedding = jax.random.normal(k_emb, (vocab, D), jnp.float32) * 0.5
    input_ids = jax.random.randint(k_ids, (B, T), 0, vocab)
    last_hidden_states = embedding[input_ids]                    # (B, T, D)

    # head parameters (nn.Linear(D, 1) for each head)
    wv = jax.random.normal(k_wv, (D,), jnp.float32) * 0.1
    wt = jax.random.normal(k_wt, (D,), jnp.float32) * 0.1
    bv = float(jax.random.normal(k_bv, ()) * 0.01)
    bt = float(jax.random.normal(k_bt, ()) * 0.01)

    # labels with -100 "ignore" sentinel at some positions
    value_labels = jax.random.uniform(k_vl, (B, T), jnp.float32, -1.0, 1.0)
    time_labels = jax.random.uniform(k_tl, (B, T), jnp.float32, 0.0, 5.0)
    value_labels = jnp.where(jax.random.bernoulli(k_m1, 0.3, (B, T)),
                             -100.0, value_labels)
    time_labels = jnp.where(jax.random.bernoulli(k_m2, 0.3, (B, T)),
                            -100.0, time_labels)
    if all_ignore_value:
        value_labels = jnp.full_like(value_labels, -100.0)

    out = regression_head_forward(
        last_hidden_states, wv, wt, bv, bt, value_labels, time_labels,
        lm_loss=lm_loss, lm_loss_coef=lm_loss_coef,
        value_loss_coef=value_loss_coef, time_loss_coef=time_loss_coef,
        tile_rows=tile_rows)
    jax.block_until_ready(out)

    rv, rt, rvl, rtl, rloss = _ref_forward(
        last_hidden_states, wv, wt, bv, bt, value_labels, time_labels,
        lm_loss, lm_loss_coef, value_loss_coef)

    assert jnp.allclose(out["value_logits"], rv, atol=1e-5), "value_logits"
    assert jnp.allclose(out["time_logits"], rt, atol=1e-5), "time_logits"
    assert jnp.allclose(out["value_loss"], rvl, atol=1e-5), "value_loss"
    assert jnp.allclose(out["time_loss"], rtl, atol=1e-5), "time_loss"
    assert jnp.allclose(out["loss"], rloss, atol=1e-5), "loss"


if __name__ == "__main__":
    # 1) single-tile path (whole B*T fits one block)
    _run_case(0, B=2, T=8, D=32)
    # 2) multi-tile + padded-tail path (N=22 rows, forced 8-row tiles ->
    #    Npad=24, 2 padded rows), nonzero lm_loss and non-unit coefs
    #    (also checks the time-loss-scaled-by-value_loss_coef quirk).
    _run_case(1, B=2, T=11, D=32, tile_rows=8, lm_loss=0.25,
              lm_loss_coef=0.5, value_loss_coef=0.7, time_loss_coef=123.0)
    # 3) all(-100) value labels -> value_loss must be exactly 0.0
    _run_case(2, B=2, T=8, D=32, all_ignore_value=True)
    print("KERNEL_OK")
</pallas_src>

<mosaic_0001>
module attributes {stable_mosaic.version = 11 : i64} {
  func.func @heads_kernel(%arg0: i32, %arg1: memref<16x32xf32, #tpu.memory_space<vmem>>, %arg2: memref<2x32xf32, #tpu.memory_space<vmem>>, %arg3: memref<16x1xf32, #tpu.memory_space<vmem>>, %arg4: memref<16x1xf32, #tpu.memory_space<vmem>>, %arg5: memref<6xf32, #tpu.memory_space<smem>>, %arg6: memref<16x1xf32, #tpu.memory_space<vmem>>, %arg7: memref<16x1xf32, #tpu.memory_space<vmem>>, %arg8: memref<1x1xf32, #tpu.memory_space<vmem>>, %arg9: memref<1x1xf32, #tpu.memory_space<vmem>>, %arg10: memref<1x1xf32, #tpu.memory_space<vmem>>, %arg11: memref<16x1xf32, #tpu.memory_space<vmem>>, %arg12: memref<16x1xf32, #tpu.memory_space<vmem>>, %arg13: memref<16x1xf32, #tpu.memory_space<vmem>>, %arg14: memref<16x1xf32, #tpu.memory_space<vmem>>) attributes {dimension_semantics = [#tpu.dimension_semantics<arbitrary>], iteration_bounds = array<i64: 1>, scalar_prefetch = 0 : i64, scratch_operands = 4 : i64, tpu.core_type = #tpu.core_type<tc>, window_params = [{transform_indices = @transform_0, window_bounds = array<i64: 16, 32>}, {pipeline_mode = #tpu.pipeline_mode<synchronous>, transform_indices = @transform_1, window_bounds = array<i64: 2, 32>}, {transform_indices = @transform_2, window_bounds = array<i64: 16, 1>}, {transform_indices = @transform_3, window_bounds = array<i64: 16, 1>}, {transform_indices = @transform_4, window_bounds = array<i64: 6>}, {transform_indices = @transform_5, window_bounds = array<i64: 16, 1>}, {transform_indices = @transform_6, window_bounds = array<i64: 16, 1>}, {pipeline_mode = #tpu.pipeline_mode<synchronous>, transform_indices = @transform_7, window_bounds = array<i64: 1, 1>}, {pipeline_mode = #tpu.pipeline_mode<synchronous>, transform_indices = @transform_8, window_bounds = array<i64: 1, 1>}, {pipeline_mode = #tpu.pipeline_mode<synchronous>, transform_indices = @transform_9, window_bounds = array<i64: 1, 1>}]} {
    %c0_i32 = arith.constant 0 : i32
    %0 = arith.cmpi eq, %arg0, %c0_i32 : i32
    %1 = arith.extui %0 : i1 to i32
    %c0_i32_0 = arith.constant 0 : i32
    %2 = arith.cmpi ne, %1, %c0_i32_0 : i32
    scf.if %2 {
      %cst_36 = arith.constant 0.000000e+00 : f32
      %54 = vector.broadcast %cst_36 : f32 to vector<16x1xf32>
      %c0_37 = arith.constant 0 : index
      %c0_38 = arith.constant 0 : index
      %55 = vector.load %arg11[%c0_37, %c0_38] : memref<16x1xf32, #tpu.memory_space<vmem>>, vector<16x1xf32>
      tpu.vector_store %arg11[%c0_37, %c0_38], %54 {strides = array<i32>} : memref<16x1xf32, #tpu.memory_space<vmem>>, vector<16x1xf32>,
      %cst_39 = arith.constant 0.000000e+00 : f32
      %56 = vector.broadcast %cst_39 : f32 to vector<16x1xf32>
      %c0_40 = arith.constant 0 : index
      %c0_41 = arith.constant 0 : index
      %57 = vector.load %arg12[%c0_40, %c0_41] : memref<16x1xf32, #tpu.memory_space<vmem>>, vector<16x1xf32>
      tpu.vector_store %arg12[%c0_40, %c0_41], %56 {strides = array<i32>} : memref<16x1xf32, #tpu.memory_space<vmem>>, vector<16x1xf32>,
      %cst_42 = arith.constant 0.000000e+00 : f32
      %58 = vector.broadcast %cst_42 : f32 to vector<16x1xf32>
      %c0_43 = arith.constant 0 : index
      %c0_44 = arith.constant 0 : index
      %59 = vector.load %arg13[%c0_43, %c0_44] : memref<16x1xf32, #tpu.memory_space<vmem>>, vector<16x1xf32>
      tpu.vector_store %arg13[%c0_43, %c0_44], %58 {strides = array<i32>} : memref<16x1xf32, #tpu.memory_space<vmem>>, vector<16x1xf32>,
      %cst_45 = arith.constant 0.000000e+00 : f32
      %60 = vector.broadcast %cst_45 : f32 to vector<16x1xf32>
      %c0_46 = arith.constant 0 : index
      %c0_47 = arith.constant 0 : index
      %61 = vector.load %arg14[%c0_46, %c0_47] : memref<16x1xf32, #tpu.memory_space<vmem>>, vector<16x1xf32>
      tpu.vector_store %arg14[%c0_46, %c0_47], %60 {strides = array<i32>} : memref<16x1xf32, #tpu.memory_space<vmem>>, vector<16x1xf32>,
    } else {
    }
    %c0 = arith.constant 0 : index
    %c0_1 = arith.constant 0 : index
    %3 = vector.load %arg1[%c0, %c0_1] : memref<16x32xf32, #tpu.memory_space<vmem>>, vector<16x32xf32>
    %c0_2 = arith.constant 0 : index
    %c0_3 = arith.constant 0 : index
    %4 = vector.load %arg2[%c0_2, %c0_3] : memref<2x32xf32, #tpu.memory_space<vmem>>, vector<1x32xf32>
    %c1 = arith.constant 1 : index
    %c0_4 = arith.constant 0 : index
    %5 = vector.load %arg2[%c1, %c0_4] : memref<2x32xf32, #tpu.memory_space<vmem>>, vector<1x32xf32>
    %6 = vector.broadcast %4 : vector<1x32xf32> to vector<16x32xf32>
    %7 = arith.mulf %3, %6 : vector<16x32xf32>
    %cst = arith.constant dense<0.000000e+00> : vector<16xf32>
    %8 = vector.multi_reduction <add>, %7, %cst [1] : vector<16x32xf32> to vector<16xf32>
    %9 = vector.shape_cast %8 : vector<16xf32> to vector<16x1xf32>
    %c0_5 = arith.constant 0 : index
    %10 = memref.load %arg5[%c0_5] : memref<6xf32, #tpu.memory_space<smem>>
    %11 = vector.broadcast %10 : f32 to vector<16x1xf32>
    %12 = arith.addf %9, %11 : vector<16x1xf32>
    %13 = vector.broadcast %5 : vector<1x32xf32> to vector<16x32xf32>
    %14 = arith.mulf %3, %13 : vector<16x32xf32>
    %cst_6 = arith.constant dense<0.000000e+00> : vector<16xf32>
    %15 = vector.multi_reduction <add>, %14, %cst_6 [1] : vector<16x32xf32> to vector<16xf32>
    %16 = vector.shape_cast %15 : vector<16xf32> to vector<16x1xf32>
    %c1_7 = arith.constant 1 : index
    %17 = memref.load %arg5[%c1_7] : memref<6xf32, #tpu.memory_space<smem>>
    %18 = vector.broadcast %17 : f32 to vector<16x1xf32>
    %19 = arith.addf %16, %18 : vector<16x1xf32>
    %20 = math.tanh %12 : vector<16x1xf32>
    %c0_8 = arith.constant 0 : index
    %c0_9 = arith.constant 0 : index
    %21 = vector.load %arg6[%c0_8, %c0_9] : memref<16x1xf32, #tpu.memory_space<vmem>>, vector<16x1xf32>
    tpu.vector_store %arg6[%c0_8, %c0_9], %20 {strides = array<i32>} : memref<16x1xf32, #tpu.memory_space<vmem>>, vector<16x1xf32>,
    %c0_10 = arith.constant 0 : index
    %c0_11 = arith.constant 0 : index
    %22 = vector.load %arg7[%c0_10, %c0_11] : memref<16x1xf32, #tpu.memory_space<vmem>>, vector<16x1xf32>
    tpu.vector_store %arg7[%c0_10, %c0_11], %19 {strides = array<i32>} : memref<16x1xf32, #tpu.memory_space<vmem>>, vector<16x1xf32>,
    %c0_12 = arith.constant 0 : index
    %c0_13 = arith.constant 0 : index
    %23 = vector.load %arg3[%c0_12, %c0_13] : memref<16x1xf32, #tpu.memory_space<vmem>>, vector<16x1xf32>
    %c0_14 = arith.constant 0 : index
    %c0_15 = arith.constant 0 : index
    %24 = vector.load %arg4[%c0_14, %c0_15] : memref<16x1xf32, #tpu.memory_space<vmem>>, vector<16x1xf32>
    %cst_16 = arith.constant -1.000000e+02 : f32
    %25 = vector.broadcast %cst_16 : f32 to vector<16x1xf32>
    %26 = arith.cmpf one, %23, %25 : vector<16x1xf32>
    %27 = arith.extui %26 : vector<16x1xi1> to vector<16x1xi32>
    %28 = arith.sitofp %27 : vector<16x1xi32> to vector<16x1xf32>
    %cst_17 = arith.constant -1.000000e+02 : f32
    %29 = vector.broadcast %cst_17 : f32 to vector<16x1xf32>
    %30 = arith.cmpf one, %24, %29 : vector<16x1xf32>
    %31 = arith.extui %30 : vector<16x1xi1> to vector<16x1xi32>
    %32 = arith.sitofp %31 : vector<16x1xi32> to vector<16x1xf32>
    %33 = arith.subf %20, %23 : vector<16x1xf32>
    %34 = arith.subf %19, %24 : vector<16x1xf32>
    %c0_18 = arith.constant 0 : index
    %c0_19 = arith.constant 0 : index
    %35 = vector.load %arg11[%c0_18, %c0_19] : memref<16x1xf32, #tpu.memory_space<vmem>>, vector<16x1xf32>
    %36 = arith.mulf %28, %33 : vector<16x1xf32>
    %37 = arith.mulf %36, %33 : vector<16x1xf32>
    %38 = arith.addf %35, %37 : vector<16x1xf32>
    %c0_20 = arith.constant 0 : index
    %c0_21 = arith.constant 0 : index
    %39 = vector.load %arg11[%c0_20, %c0_21] : memref<16x1xf32, #tpu.memory_space<vmem>>, vector<16x1xf32>
    tpu.vector_store %arg11[%c0_20, %c0_21], %38 {strides = array<i32>} : memref<16x1xf32, #tpu.memory_space<vmem>>, vector<16x1xf32>,
    %c0_22 = arith.constant 0 : index
    %c0_23 = arith.constant 0 : index
    %40 = vector.load %arg12[%c0_22, %c0_23] : memref<16x1xf32, #tpu.memory_space<vmem>>, vector<16x1xf32>
    %41 = arith.addf %40, %28 : vector<16x1xf32>
    %c0_24 = arith.constant 0 : index
    %c0_25 = arith.constant 0 : index
    %42 = vector.load %arg12[%c0_24, %c0_25] : memref<16x1xf32, #tpu.memory_space<vmem>>, vector<16x1xf32>
    tpu.vector_store %arg12[%c0_24, %c0_25], %41 {strides = array<i32>} : memref<16x1xf32, #tpu.memory_space<vmem>>, vector<16x1xf32>,
    %c0_26 = arith.constant 0 : index
    %c0_27 = arith.constant 0 : index
    %43 = vector.load %arg13[%c0_26, %c0_27] : memref<16x1xf32, #tpu.memory_space<vmem>>, vector<16x1xf32>
    %44 = arith.mulf %32, %34 : vector<16x1xf32>
    %45 = arith.mulf %44, %34 : vector<16x1xf32>
    %46 = arith.addf %43, %45 : vector<16x1xf32>
    %c0_28 = arith.constant 0 : index
    %c0_29 = arith.constant 0 : index
    %47 = vector.load %arg13[%c0_28, %c0_29] : memref<16x1xf32, #tpu.memory_space<vmem>>, vector<16x1xf32>
    tpu.vector_store %arg13[%c0_28, %c0_29], %46 {strides = array<i32>} : memref<16x1xf32, #tpu.memory_space<vmem>>, vector<16x1xf32>,
    %c0_30 = arith.constant 0 : index
    %c0_31 = arith.constant 0 : index
    %48 = vector.load %arg14[%c0_30, %c0_31] : memref<16x1xf32, #tpu.memory_space<vmem>>, vector<16x1xf32>
    %49 = arith.addf %48, %32 : vector<16x1xf32>
    %c0_32 = arith.constant 0 : index
    %c0_33 = arith.constant 0 : index
    %50 = vector.load %arg14[%c0_32, %c0_33] : memref<16x1xf32, #tpu.memory_space<vmem>>, vector<16x1xf32>
    tpu.vector_store %arg14[%c0_32, %c0_33], %49 {strides = array<i32>} : memref<16x1xf32, #tpu.memory_space<vmem>>, vector<16x1xf32>,
    %c0_i32_34 = arith.constant 0 : i32
    %51 = arith.cmpi eq, %arg0, %c0_i32_34 : i32
    %52 = arith.extui %51 : i1 to i32
    %c0_i32_35 = arith.constant 0 : i32
    %53 = arith.cmpi ne, %52, %c0_i32_35 : i32
    scf.if %53 {
      %c0_36 = arith.constant 0 : index
      %c0_37 = arith.constant 0 : index
      %54 = vector.load %arg11[%c0_36, %c0_37] : memref<16x1xf32, #tpu.memory_space<vmem>>, vector<16x1xf32>
      %cst_38 = arith.constant dense<0.000000e+00> : vector<1xf32>
      %55 = vector.multi_reduction <add>, %54, %cst_38 [0] : vector<16x1xf32> to vector<1xf32>
      %56 = vector.shape_cast %55 : vector<1xf32> to vector<1x1xf32>
      %c0_39 = arith.constant 0 : index
      %c0_40 = arith.constant 0 : index
      %57 = vector.load %arg12[%c0_39, %c0_40] : memref<16x1xf32, #tpu.memory_space<vmem>>, vector<16x1xf32>
      %cst_41 = arith.constant dense<0.000000e+00> : vector<1xf32>
      %58 = vector.multi_reduction <add>, %57, %cst_41 [0] : vector<16x1xf32> to vector<1xf32>
      %59 = vector.shape_cast %58 : vector<1xf32> to vector<1x1xf32>
      %c0_42 = arith.constant 0 : index
      %c0_43 = arith.constant 0 : index
      %60 = vector.load %arg13[%c0_42, %c0_43] : memref<16x1xf32, #tpu.memory_space<vmem>>, vector<16x1xf32>
      %cst_44 = arith.constant dense<0.000000e+00> : vector<1xf32>
      %61 = vector.multi_reduction <add>, %60, %cst_44 [0] : vector<16x1xf32> to vector<1xf32>
      %62 = vector.shape_cast %61 : vector<1xf32> to vector<1x1xf32>
      %c0_45 = arith.constant 0 : index
      %c0_46 = arith.constant 0 : index
      %63 = vector.load %arg14[%c0_45, %c0_46] : memref<16x1xf32, #tpu.memory_space<vmem>>, vector<16x1xf32>
      %cst_47 = arith.constant dense<0.000000e+00> : vector<1xf32>
      %64 = vector.multi_reduction <add>, %63, %cst_47 [0] : vector<16x1xf32> to vector<1xf32>
      %65 = vector.shape_cast %64 : vector<1xf32> to vector<1x1xf32>
      %cst_48 = arith.constant 0.000000e+00 : f32
      %66 = vector.broadcast %cst_48 : f32 to vector<1x1xf32>
      %67 = arith.cmpf ogt, %59, %66 : vector<1x1xf32>
      %cst_49 = arith.constant 1.000000e+00 : f32
      %68 = vector.broadcast %cst_49 : f32 to vector<1x1xf32>
      %69 = arith.maximumf %59, %68 : vector<1x1xf32>
      %70 = arith.divf %56, %69 : vector<1x1xf32>
      %cst_50 = arith.constant 0.000000e+00 : f32
      %71 = vector.broadcast %cst_50 : f32 to vector<1x1xf32>
      %72 = arith.select %67, %70, %71 : vector<1x1xi1>, vector<1x1xf32>
      %cst_51 = arith.constant 0.000000e+00 : f32
      %73 = vector.broadcast %cst_51 : f32 to vector<1x1xf32>
      %74 = arith.cmpf ogt, %65, %73 : vector<1x1xf32>
      %cst_52 = arith.constant 1.000000e+00 : f32
      %75 = vector.broadcast %cst_52 : f32 to vector<1x1xf32>
      %76 = arith.maximumf %65, %75 : vector<1x1xf32>
      %77 = arith.divf %62, %76 : vector<1x1xf32>
      %cst_53 = arith.constant 0.000000e+00 : f32
      %78 = vector.broadcast %cst_53 : f32 to vector<1x1xf32>
      %79 = arith.select %74, %77, %78 : vector<1x1xi1>, vector<1x1xf32>
      %c0_54 = arith.constant 0 : index
      %c0_55 = arith.constant 0 : index
      %80 = vector.load %arg8[%c0_54, %c0_55] : memref<1x1xf32, #tpu.memory_space<vmem>>, vector<1x1xf32>
      tpu.vector_store %arg8[%c0_54, %c0_55], %72 {strides = array<i32>} : memref<1x1xf32, #tpu.memory_space<vmem>>, vector<1x1xf32>,
      %c0_56 = arith.constant 0 : index
      %c0_57 = arith.constant 0 : index
      %81 = vector.load %arg9[%c0_56, %c0_57] : memref<1x1xf32, #tpu.memory_space<vmem>>, vector<1x1xf32>
      tpu.vector_store %arg9[%c0_56, %c0_57], %79 {strides = array<i32>} : memref<1x1xf32, #tpu.memory_space<vmem>>, vector<1x1xf32>,
      %c2 = arith.constant 2 : index
      %82 = memref.load %arg5[%c2] : memref<6xf32, #tpu.memory_space<smem>>
      %c3 = arith.constant 3 : index
      %83 = memref.load %arg5[%c3] : memref<6xf32, #tpu.memory_space<smem>>
      %84 = arith.mulf %82, %83 : f32
      %c4 = arith.constant 4 : index
      %85 = memref.load %arg5[%c4] : memref<6xf32, #tpu.memory_space<smem>>
      %86 = vector.broadcast %85 : f32 to vector<1x1xf32>
      %87 = arith.mulf %72, %86 : vector<1x1xf32>
      %88 = vector.broadcast %84 : f32 to vector<1x1xf32>
      %89 = arith.addf %88, %87 : vector<1x1xf32>
      %90 = vector.broadcast %85 : f32 to vector<1x1xf32>
      %91 = arith.mulf %79, %90 : vector<1x1xf32>
      %92 = arith.addf %89, %91 : vector<1x1xf32>
      %c0_58 = arith.constant 0 : index
      %c0_59 = arith.constant 0 : index
      %93 = vector.load %arg10[%c0_58, %c0_59] : memref<1x1xf32, #tpu.memory_space<vmem>>, vector<1x1xf32>
      tpu.vector_store %arg10[%c0_58, %c0_59], %92 {strides = array<i32>} : memref<1x1xf32, #tpu.memory_space<vmem>>, vector<1x1xf32>,
    } else {
    }
    return
  }
  func.func @transform_0(%arg0: i32) -> (i32, i32) {
    %c0_i32 = arith.constant 0 : i32
    %c0_i32_0 = arith.constant 0 : i32
    return %arg0, %c0_i32 : i32, i32
  }
  func.func @transform_1(%arg0: i32) -> (i32, i32) {
    %c0_i32 = arith.constant 0 : i32
    %c0_i32_0 = arith.constant 0 : i32
    %c0_i32_1 = arith.constant 0 : i32
    return %c0_i32, %c0_i32_0 : i32, i32
  }
  func.func @transform_2(%arg0: i32) -> (i32, i32) {
    %c0_i32 = arith.constant 0 : i32
    %c0_i32_0 = arith.constant 0 : i32
    return %arg0, %c0_i32 : i32, i32
  }
  func.func @transform_3(%arg0: i32) -> (i32, i32) {
    %c0_i32 = arith.constant 0 : i32
    %c0_i32_0 = arith.constant 0 : i32
    return %arg0, %c0_i32 : i32, i32
  }
  func.func @transform_4(%arg0: i32) -> i32 {
    %c0_i32 = arith.constant 0 : i32
    %c0_i32_0 = arith.constant 0 : i32
    return %c0_i32 : i32
  }
  func.func @transform_5(%arg0: i32) -> (i32, i32) {
    %c0_i32 = arith.constant 0 : i32
    %c0_i32_0 = arith.constant 0 : i32
    return %arg0, %c0_i32 : i32, i32
  }
  func.func @transform_6(%arg0: i32) -> (i32, i32) {
    %c0_i32 = arith.constant 0 : i32
    %c0_i32_0 = arith.constant 0 : i32
    return %arg0, %c0_i32 : i32, i32
  }
  func.func @transform_7(%arg0: i32) -> (i32, i32) {
    %c0_i32 = arith.constant 0 : i32
    %c0_i32_0 = arith.constant 0 : i32
    %c0_i32_1 = arith.constant 0 : i32
    return %c0_i32, %c0_i32_0 : i32, i32
  }
  func.func @transform_8(%arg0: i32) -> (i32, i32) {
    %c0_i32 = arith.constant 0 : i32
    %c0_i32_0 = arith.constant 0 : i32
    %c0_i32_1 = arith.constant 0 : i32
    return %c0_i32, %c0_i32_0 : i32, i32
  }
  func.func @transform_9(%arg0: i32) -> (i32, i32) {
    %c0_i32 = arith.constant 0 : i32
    %c0_i32_0 = arith.constant 0 : i32
    %c0_i32_1 = arith.constant 0 : i32
    return %c0_i32, %c0_i32_0 : i32, i32
  }
}

</mosaic_0001>

<llo_original>
// kernel: tpu_custom_call.1
$region0: #{tpu_custom_call.1}
  #allocation0 [shape = 'u32[]', space=smem, size = 0x4, offset = 0x4, fixed_abs, tag = 'smem constant byte address 0x4 - core index']
  #allocation1 [shape = 'u32[144,128]{1,0:T(1,128)}', space=vmem, size = 0x12000, scoped, tag = 'internal scratch']
  #allocation2 [shape = 'f32[16,1]{1,0:T(8,128)}', space=vmem, size = 0x2000, scoped, tag = 'scratch operand']
  #allocation3 [shape = 'f32[16,1]{1,0:T(8,128)}', space=vmem, size = 0x2000, scoped, tag = 'scratch operand']
  #allocation4 [shape = 'f32[16,1]{1,0:T(8,128)}', space=vmem, size = 0x2000, scoped, tag = 'scratch operand']
  #allocation5 [shape = 'f32[16,1]{1,0:T(8,128)}', space=vmem, size = 0x2000, scoped, tag = 'scratch operand']
  %s0 = inlined_call_operand.vmem [shape: f32[16,32], index: 0, kind: input, shape index: {}]
  %s1 = inlined_call_operand.vmem [shape: f32[2,32], index: 1, kind: input, shape index: {}]
  %s2 = inlined_call_operand.vmem [shape: f32[16,1], index: 2, kind: input, shape index: {}]
  %s3 = inlined_call_operand.vmem [shape: f32[16,1], index: 3, kind: input, shape index: {}]
  %s4 = inlined_call_operand.vmem [shape: f32[6], index: 4, kind: input, shape index: {}]
  %s5 = inlined_call_operand.vmem [shape: f32[16,1], index: 5, kind: output, shape index: {0}]
  %s6 = inlined_call_operand.vmem [shape: f32[16,1], index: 6, kind: output, shape index: {1}]
  %s7 = inlined_call_operand.hbm [shape: f32[1,1], index: 7, kind: output, shape index: {2}]
  %s8 = inlined_call_operand.hbm [shape: f32[1,1], index: 8, kind: output, shape index: {3}]
  %s9 = inlined_call_operand.hbm [shape: f32[1,1], index: 9, kind: output, shape index: {4}]
  %10 = xla_tuple %s5, %s6, %s7, %s8, %s9
  %s11 = sld [smem:[#allocation0]]
  $region74: #{tpu_custom_call.1} parent=0
    _
  %s13 = ssub.s32 1, %s11
  %s14 = scalar_select 0, %s13, %s11
  $region1: #{tpu_custom_call.1} parent=0
    #allocation6 [shape = 'u8[512]{0}', space=smem, size = 0x200, scoped, tag = 'input window, operand 4, single buffered']
    #allocation7 [shape = 's32[1]{0}', space=sflag, size = 0x4, scoped, tag = 'scoped memory for tpu_custom_call.1']
    #allocation8 [shape = 's32[1]{0}', space=sflag, size = 0x4, scoped, tag = 'scoped memory for tpu_custom_call.1']
    #allocation9 [shape = 'u8[512]{0}', space=vmem, size = 0x400, scoped, tag = 'output window, operand 2, single buffered']
    #allocation10 [shape = 'u8[512]{0}', space=vmem, size = 0x400, scoped, tag = 'output window, operand 3, single buffered']
    #allocation11 [shape = 's32[1]{0}', space=sflag, size = 0x4, scoped, tag = 'scoped memory for tpu_custom_call.1']
    #allocation12 [shape = 'u8[512]{0}', space=vmem, size = 0x400, scoped, tag = 'output window, operand 4, single buffered']
    %15 = vsyncpa [#allocation8], 0
    %16 = vsyncpa [#allocation7], 0
    %17 = vsyncpa [#allocation11], 0
    // Predicated region
    $region2: #{tpu_custom_call.1} parent=1 // pred_check
      _
    $region3: #{tpu_custom_call.1} parent=1 // pred_check_branch
      %19 = sbr.rel (0) target = $region5
    $region4: #{tpu_custom_call.1} parent=1 // pred_region
      _
    $region5: #{tpu_custom_call.1} parent=1 // pred_fallthru
      _
    // Predicated region
    $region6: #{tpu_custom_call.1} parent=1 // pred_check
      _
    $region7: #{tpu_custom_call.1} parent=1 // pred_check_branch
      %21 = sbr.rel (0) target = $region9
    $region8: #{tpu_custom_call.1} parent=1 // pred_region
      _
    $region9: #{tpu_custom_call.1} parent=1 // pred_fallthru
      _
    // Predicated region
    $region10: #{tpu_custom_call.1} parent=1 // pred_check
      _
    $region11: #{tpu_custom_call.1} parent=1 // pred_check_branch
      %23 = sbr.rel (0) target = $region13
    $region12: #{tpu_custom_call.1} parent=1 // pred_region
      _
    $region13: #{tpu_custom_call.1} parent=1 // pred_fallthru
      _
    // Predicated region
    $region14: #{tpu_custom_call.1} parent=1 // pred_check
      _
    $region15: #{tpu_custom_call.1} parent=1 // pred_check_branch
      %25 = sbr.rel (0) target = $region17
    $region16: #{tpu_custom_call.1} parent=1 // pred_region
      _
    $region17: #{tpu_custom_call.1} parent=1 // pred_fallthru
      _
    // Predicated region
    $region18: #{tpu_custom_call.1} parent=1 // pred_check
      _
    $region19: #{tpu_custom_call.1} parent=1 // pred_check_branch
      %27 = sbr.rel (0) target = $region21
    $region20: #{tpu_custom_call.1} parent=1 // pred_region
      %s29 = ssub.s32 16, 16
      %30 = vsyncadd [#allocation8], %s29
      %s32 = sshll.u32 %s4, 4
      %s33 = int_to_ptr.vmem [resolvable:$true] %s32
      %35 = dma.vmem_to_smem %s33, 16, [#allocation6], [#allocation8]
    $region21: #{tpu_custom_call.1} parent=1 // pred_fallthru
      _
    // Predicated region
    $region22: #{tpu_custom_call.1} parent=1 // pred_check
      _
    $region23: #{tpu_custom_call.1} parent=1 // pred_check_branch
      %37 = sbr.rel (0) target = $region25
    $region24: #{tpu_custom_call.1} parent=1 // pred_region
      %38 = dma.done [#allocation8], 16
    $region25: #{tpu_custom_call.1} parent=1 // pred_fallthru
      _
    %39 = sfence
    %p40 = scmp.eq.s32.totalorder 0, 0
    // Predicated region
    $region26: #{tpu_custom_call.1} parent=1 // pred_check
      %p41 = pneg %p40
    $region27: #{tpu_custom_call.1} parent=1 // pred_check_branch
      %43 = sbr.rel (%p41) target = $region29
    $region28: #{tpu_custom_call.1} parent=1 // pred_region
      %vm44 = vcmask 7168
      %45 = vst.msk [vmem:[#allocation2] sm:$0xff] %vm44, 0.0
      %46 = vst.msk [vmem:[#allocation2 + $0x8] sm:$0xff] %vm44, 0.0
      %47 = vst.msk [vmem:[#allocation3] sm:$0xff] %vm44, 0.0
      %48 = vst.msk [vmem:[#allocation3 + $0x8] sm:$0xff] %vm44, 0.0
      %49 = vst.msk [vmem:[#allocation4] sm:$0xff] %vm44, 0.0
      %50 = vst.msk [vmem:[#allocation4 + $0x8] sm:$0xff] %vm44, 0.0
      %51 = vst.msk [vmem:[#allocation5] sm:$0xff] %vm44, 0.0
      %52 = vst.msk [vmem:[#allocation5 + $0x8] sm:$0xff] %vm44, 0.0
    $region29: #{tpu_custom_call.1} parent=1 // pred_fallthru
      _
    %v53 = vld [vmem:[%s0] sm:$0xff]
    %v54 = vld [vmem:[%s0 + $0x8] sm:$0xff]
    %v55 = vld [vmem:[%s1] sm:$0x1]
    %v56 = vld [vmem:[%s1 + $0x1] sm:$0x1]
    %v57 = vlaneseq
    %v58 = vshrl.u32 %v57, 7
    %v59 = vsub.s32 0, %v58
    %v60 = vrot.slane %v55, %v59
    %v61 = vmul.f32 %v53, %v60
    %v62 = vmul.f32 %v54, %v60
    %vm63 = vcmask 261120
    %v64 = vsel %vm63, %v61, 0.0
    %65 = vadd.xlane.f32.xlu0 %v64
    %v66 = vpop.xlane.xlu0 %65
    %v67 = vsel %vm63, %v62, 0.0
    %68 = vadd.xlane.f32.xlu0 %v67
    %v69 = vpop.xlane.xlu0 %68
    %s70 = sld [smem:[#allocation6]]
    %v71 = vstv %s70
    %v72 = vadd.f32 %v66, %v71
    %v73 = vadd.f32 %v69, %v71
    %v74 = vlaneseq
    %v75 = vshrl.u32 %v74, 7
    %v76 = vsub.s32 0, %v75
    %v77 = vrot.slane %v56, %v76
    %v78 = vmul.f32 %v53, %v77
    %v79 = vmul.f32 %v54, %v77
    %v80 = vsel %vm63, %v78, 0.0
    %81 = vadd.xlane.f32.xlu0 %v80
    %v82 = vpop.xlane.xlu0 %81
    %v83 = vsel %vm63, %v79, 0.0
    %84 = vadd.xlane.f32.xlu0 %v83
    %v85 = vpop.xlane.xlu0 %84
    %s86 = sld [smem:[#allocation6 + $0x1]]
    %v87 = vstv %s86
    %v88 = vadd.f32 %v82, %v87
    %v89 = vadd.f32 %v85, %v87
    %v90 = vtanh.pop %v72
    %v91 = vtanh.pop %v73
    %vm92 = vcmask 7168
    %93 = vst.msk [vmem:[%s5] sm:$0xff] %vm92, %v90
    %94 = vst.msk [vmem:[%s5 + $0x8] sm:$0xff] %vm92, %v91
    %95 = vst.msk [vmem:[%s6] sm:$0xff] %vm92, %v88
    %96 = vst.msk [vmem:[%s6 + $0x8] sm:$0xff] %vm92, %v89
    %v97 = vld [vmem:[%s2] sm:$0xff]
    %v98 = vld [vmem:[%s2 + $0x8] sm:$0xff]
    %v99 = vld [vmem:[%s3] sm:$0xff]
    %v100 = vld [vmem:[%s3 + $0x8] sm:$0xff]
    %vm101 = vcmp.ne.f32.partialorder %v97, -100.0
    %vm102 = vcmp.ne.f32.partialorder %v98, -100.0
    %v103 = vsel %vm101, 1, 0
    %v104 = vsel %vm102, 1, 0
    %v105 = vcvt.s32.f32 %v103
    %v106 = vcvt.s32.f32 %v104
    %vm107 = vcmp.ne.f32.partialorder %v99, -100.0
    %vm108 = vcmp.ne.f32.partialorder %v100, -100.0
    %v109 = vsel %vm107, 1, 0
    %v110 = vsel %vm108, 1, 0
    %v111 = vcvt.s32.f32 %v109
    %v112 = vcvt.s32.f32 %v110
    %v113 = vsub.f32 %v90, %v97
    %v114 = vsub.f32 %v91, %v98
    %v115 = vsub.f32 %v88, %v99
    %v116 = vsub.f32 %v89, %v100
    %v117 = vld [vmem:[#allocation2] sm:$0xff]
    %v118 = vld [vmem:[#allocation2 + $0x8] sm:$0xff]
    %v119 = vmul.f32 %v105, %v113
    %v120 = vmul.f32 %v106, %v114
    %v121 = vmul.f32 %v119, %v113
    %v122 = vmul.f32 %v120, %v114
    %v123 = vadd.f32 %v117, %v121
    %v124 = vadd.f32 %v118, %v122
    %125 = vst.msk [vmem:[#allocation2] sm:$0xff] %vm92, %v123
    %126 = vst.msk [vmem:[#allocation2 + $0x8] sm:$0xff] %vm92, %v124
    %v127 = vld [vmem:[#allocation3] sm:$0xff]
    %v128 = vld [vmem:[#allocation3 + $0x8] sm:$0xff]
    %v129 = vadd.f32 %v127, %v105
    %v130 = vadd.f32 %v128, %v106
    %131 = vst.msk [vmem:[#allocation3] sm:$0xff] %vm92, %v129
    %132 = vst.msk [vmem:[#allocation3 + $0x8] sm:$0xff] %vm92, %v130
    %v133 = vld [vmem:[#allocation4] sm:$0xff]
    %v134 = vld [vmem:[#allocation4 + $0x8] sm:$0xff]
    %v135 = vmul.f32 %v111, %v115
    %v136 = vmul.f32 %v112, %v116
    %v137 = vmul.f32 %v135, %v115
    %v138 = vmul.f32 %v136, %v116
    %v139 = vadd.f32 %v133, %v137
    %v140 = vadd.f32 %v134, %v138
    %141 = vst.msk [vmem:[#allocation4] sm:$0xff] %vm92, %v139
    %142 = vst.msk [vmem:[#allocation4 + $0x8] sm:$0xff] %vm92, %v140
    %v143 = vld [vmem:[#allocation5] sm:$0xff]
    %v144 = vld [vmem:[#allocation5 + $0x8] sm:$0xff]
    %v145 = vadd.f32 %v143, %v111
    %v146 = vadd.f32 %v144, %v112
    %147 = vst.msk [vmem:[#allocation5] sm:$0xff] %vm92, %v145
    %148 = vst.msk [vmem:[#allocation5 + $0x8] sm:$0xff] %vm92, %v146
    // Predicated region
    $region30: #{tpu_custom_call.1} parent=1 // pred_check
      %p149 = pneg %p40
    $region31: #{tpu_custom_call.1} parent=1 // pred_check_branch
      %151 = sbr.rel (%p149) target = $region33
    $region32: #{tpu_custom_call.1} parent=1 // pred_region
      %v152 = vld [vmem:[#allocation2] sm:$0xff]
      %v153 = vld [vmem:[#allocation2 + $0x8] sm:$0xff]
      %v154 = vsel %vm92, %v152, 0.0
      %v155 = vsel %vm92, %v153, 0.0
      %v156 = vadd.f32 %v154, %v155
      %v157 = vrot.slane %v156, 4
      %v158 = vadd.f32 %v156, %v157
      %v159 = vrot.slane %v158, 2
      %v160 = vadd.f32 %v158, %v159
      %v161 = vrot.slane %v160, 1
      %v162 = vadd.f32 %v160, %v161
      %v163 = vld [vmem:[#allocation3] sm:$0xff]
      %v164 = vld [vmem:[#allocation3 + $0x8] sm:$0xff]
      %v165 = vsel %vm92, %v163, 0.0
      %v166 = vsel %vm92, %v164, 0.0
      %v167 = vadd.f32 %v165, %v166
      %v168 = vrot.slane %v167, 4
      %v169 = vadd.f32 %v167, %v168
      %v170 = vrot.slane %v169, 2
      %v171 = vadd.f32 %v169, %v170
      %v172 = vrot.slane %v171, 1
      %v173 = vadd.f32 %v171, %v172
      %v174 = vld [vmem:[#allocation4] sm:$0xff]
      %v175 = vld [vmem:[#allocation4 + $0x8] sm:$0xff]
      %v176 = vsel %vm92, %v174, 0.0
      %v177 = vsel %vm92, %v175, 0.0
      %v178 = vadd.f32 %v176, %v177
      %v179 = vrot.slane %v178, 4
      %v180 = vadd.f32 %v178, %v179
      %v181 = vrot.slane %v180, 2
      %v182 = vadd.f32 %v180, %v181
      %v183 = vrot.slane %v182, 1
      %v184 = vadd.f32 %v182, %v183
      %v185 = vld [vmem:[#allocation5] sm:$0xff]
      %v186 = vld [vmem:[#allocation5 + $0x8] sm:$0xff]
      %v187 = vsel %vm92, %v185, 0.0
      %v188 = vsel %vm92, %v186, 0.0
      %v189 = vadd.f32 %v187, %v188
      %v190 = vrot.slane %v189, 4
      %v191 = vadd.f32 %v189, %v190
      %v192 = vrot.slane %v191, 2
      %v193 = vadd.f32 %v191, %v192
      %v194 = vrot.slane %v193, 1
      %v195 = vadd.f32 %v193, %v194
      %vm196 = vcmp.gt.f32.partialorder %v173, 0.0
      %v197 = vmax.f32 %v173, 1.0
      %v198 = vrcp.pop %v197
      %v199 = vmul.f32 %v162, %v198
      %v200 = vsel %vm196, %v199, 0.0
      %vm201 = vcmp.gt.f32.partialorder %v195, 0.0
      %v202 = vmax.f32 %v195, 1.0
      %v203 = vrcp.pop %v202
      %v204 = vmul.f32 %v184, %v203
      %v205 = vsel %vm201, %v204, 0.0
      %vm206 = vcmask 0
      %207 = vst.msk [vmem:[#allocation9] sm:$0x1] %vm206, %v200
      %208 = vst.msk [vmem:[#allocation10] sm:$0x1] %vm206, %v205
      %s209 = sld [smem:[#allocation6 + $0x2]]
      %s210 = sld [smem:[#allocation6 + $0x3]]
      %s211 = smul.f32 %s209, %s210
      %s212 = sld [smem:[#allocation6 + $0x4]]
      %v213 = vstv %s212
      %v214 = vmul.f32 %v200, %v213
      %v215 = vstv %s211
      %v216 = vadd.f32 %v215, %v214
      %v217 = vmul.f32 %v205, %v213
      %v218 = vadd.f32 %v216, %v217
      %219 = vst.msk [vmem:[#allocation12] sm:$0x1] %vm206, %v218
    $region33: #{tpu_custom_call.1} parent=1 // pred_fallthru
      _
    // Predicated region
    $region34: #{tpu_custom_call.1} parent=1 // pred_check
      _
    $region35: #{tpu_custom_call.1} parent=1 // pred_check_branch
      %221 = sbr.rel (0) target = $region37
    $region36: #{tpu_custom_call.1} parent=1 // pred_region
      _
    $region37: #{tpu_custom_call.1} parent=1 // pred_fallthru
      _
    // Predicated region
    $region38: #{tpu_custom_call.1} parent=1 // pred_check
      _
    $region39: #{tpu_custom_call.1} parent=1 // pred_check_branch
      %223 = sbr.rel (0) target = $region41
    $region40: #{tpu_custom_call.1} parent=1 // pred_region
      _
    $region41: #{tpu_custom_call.1} parent=1 // pred_fallthru
      _
    // Predicated region
    $region42: #{tpu_custom_call.1} parent=1 // pred_check
      _
    $region43: #{tpu_custom_call.1} parent=1 // pred_check_branch
      %225 = sbr.rel (0) target = $region45
    $region44: #{tpu_custom_call.1} parent=1 // pred_region
      %s227 = ssub.s32 16, 16
      %228 = vsyncadd [#allocation7], %s227
      %s230 = sshll.u32 [#allocation9], 4
      %s231 = int_to_ptr.vmem [resolvable:$true] %s230
      %233 = dma.vmem_to_hbm [thread:$0]  %s231, 16, %s7, [#allocation7]
    $region45: #{tpu_custom_call.1} parent=1 // pred_fallthru
      _
    // Predicated region
    $region46: #{tpu_custom_call.1} parent=1 // pred_check
      _
    $region47: #{tpu_custom_call.1} parent=1 // pred_check_branch
      %235 = sbr.rel (0) target = $region49
    $region48: #{tpu_custom_call.1} parent=1 // pred_region
      %s237 = ssub.s32 16, 16
      %238 = vsyncadd [#allocation11], %s237
      %s240 = sshll.u32 [#allocation10], 4
      %s241 = int_to_ptr.vmem [resolvable:$true] %s240
      %243 = dma.vmem_to_hbm [thread:$0]  %s241, 16, %s8, [#allocation11]
    $region49: #{tpu_custom_call.1} parent=1 // pred_fallthru
      _
    // Predicated region
    $region50: #{tpu_custom_call.1} parent=1 // pred_check
      _
    $region51: #{tpu_custom_call.1} parent=1 // pred_check_branch
      %245 = sbr.rel (0) target = $region53
    $region52: #{tpu_custom_call.1} parent=1 // pred_region
      %s247 = ssub.s32 16, 16
      %248 = vsyncadd [#allocation11], %s247
      %s250 = sshll.u32 [#allocation12], 4
      %s251 = int_to_ptr.vmem [resolvable:$true] %s250
      %253 = dma.vmem_to_hbm [thread:$0]  %s251, 16, %s9, [#allocation11]
    $region53: #{tpu_custom_call.1} parent=1 // pred_fallthru
      _
    // Predicated region
    $region54: #{tpu_custom_call.1} parent=1 // pred_check
      _
    $region55: #{tpu_custom_call.1} parent=1 // pred_check_branch
      %255 = sbr.rel (0) target = $region57
    $region56: #{tpu_custom_call.1} parent=1 // pred_region
      _
    $region57: #{tpu_custom_call.1} parent=1 // pred_fallthru
      _
    // Predicated region
    $region58: #{tpu_custom_call.1} parent=1 // pred_check
      _
    $region59: #{tpu_custom_call.1} parent=1 // pred_check_branch
      %257 = sbr.rel (0) target = $region61
    $region60: #{tpu_custom_call.1} parent=1 // pred_region
      _
    $region61: #{tpu_custom_call.1} parent=1 // pred_fallthru
      _
    // Predicated region
    $region62: #{tpu_custom_call.1} parent=1 // pred_check
      _
    $region63: #{tpu_custom_call.1} parent=1 // pred_check_branch
      %259 = sbr.rel (0) target = $region65
    $region64: #{tpu_custom_call.1} parent=1 // pred_region
      %260 = dma.done [#allocation7], 16
    $region65: #{tpu_custom_call.1} parent=1 // pred_fallthru
      _
    // Predicated region
    $region66: #{tpu_custom_call.1} parent=1 // pred_check
      _
    $region67: #{tpu_custom_call.1} parent=1 // pred_check_branch
      %262 = sbr.rel (0) target = $region69
    $region68: #{tpu_custom_call.1} parent=1 // pred_region
      %263 = dma.done [#allocation11], 16
    $region69: #{tpu_custom_call.1} parent=1 // pred_fallthru
      _
    // Predicated region
    $region70: #{tpu_custom_call.1} parent=1 // pred_check
      _
    $region71: #{tpu_custom_call.1} parent=1 // pred_check_branch
      %265 = sbr.rel (0) target = $region73
    $region72: #{tpu_custom_call.1} parent=1 // pred_region
      %266 = dma.done [#allocation11], 16
    $region73: #{tpu_custom_call.1} parent=1 // pred_fallthru
      _
    %267 = vsyncpa [#allocation7], 1
    %268 = vsyncpa [#allocation11], 1
    %269 = vsyncpa [#allocation8], 1

</llo_original>
